<compile_context>
chip_gen: v6e
topology: v6e:2x2x1
jax: 0.10.0
libtpu: 0.0.40
codegen_flags: <defaults>
</compile_context>

<pallas_src>
import functools

import jax
import jax.numpy as jnp
from jax import lax
from jax.experimental import pallas as pl
from jax.experimental.pallas import tpu as pltpu

LANES = 128
SUBLANES = 8
MAX_ROW_TILE = 4096                 # (4096,128) f32 block = 2 MiB per stream
VMEM_LIMIT_BYTES = 32 * 1024 * 1024  # 2 streams x 2 bufs x 2 MiB = 8 MiB + slack
FOLD_CANDIDATES = (64, 32, 16, 8)    # accumulator heights (multiples of 8)


def _num_core_splits():
    """2 on dual-TensorCore parts (v7x family), 1 on single-TC v5e/v6e."""
    try:
        kind = jax.devices()[0].device_kind.lower()
    except Exception:
        return 1
    return 2 if "7" in kind else 1


def _bce_partial_kernel(pred_ref, tgt_ref, out_ref, acc_ref, *,
                        n_valid, row_tile, fold_rows, blocks_per_core):
    """Accumulate per-element stable BCE-with-logits into a VMEM accumulator."""
    c = pl.program_id(0)   # core split ("parallel")
    i = pl.program_id(1)   # reduction axis ("arbitrary")

    @pl.when(i == 0)
    def _():
        acc_ref[...] = jnp.zeros_like(acc_ref)

    x = pred_ref[...].astype(jnp.float32)
    z = tgt_ref[...].astype(jnp.float32)
    # Numerically-stable BCE with logits: max(x,0) - x*z + log1p(exp(-|x|))
    bce = jnp.maximum(x, 0.0) - x * z + jnp.log1p(jnp.exp(-jnp.abs(x)))

    # In-kernel tail masking (replaces the old wrapper-side jnp.pad, which
    # materialized a full padded HBM copy).  Element ids are exact, so both
    # the ragged last block and any over-hanging (clamped/duplicated) blocks
    # from the core split contribute exactly zero.  int32 ids: valid n < 2**31.
    nominal_blk = c * blocks_per_core + i
    row0 = nominal_blk * row_tile
    row_iota = lax.broadcasted_iota(jnp.int32, bce.shape, 0)
    lane_iota = lax.broadcasted_iota(jnp.int32, bce.shape, 1)
    elem_id = (row0 + row_iota) * LANES + lane_iota
    bce = jnp.where(elem_id < n_valid, bce, 0.0)

    if row_tile == fold_rows:
        acc_ref[...] += bce
    else:
        # Fold (row_tile,128) -> (fold_rows,128): fold_rows//8 independent
        # vadd chains of length row_tile//fold_rows (ILP across VALU slots).
        acc_ref[...] += bce.reshape(-1, fold_rows, LANES).sum(axis=0)

    @pl.when(i == pl.num_programs(1) - 1)
    def _():
        out_ref[...] = acc_ref[...]


def focal_loss(pred, target, alpha=0.25, gamma=2.0):
    """Pallas TPU implementation of FocalLoss.forward (returns scalar f32)."""
    assert pred.shape == target.shape
    n = pred.size

    pred_flat = pred.reshape(-1)
    tgt_flat = target.reshape(-1)   # native dtype; cast happens inside kernel

    pad = (-n) % LANES
    if pad:
        # TODO(synk): handle the <128-element remainder with a tiny second
        # pallas_call instead of this pad (the pad materializes an HBM copy).
        pred_flat = jnp.pad(pred_flat, (0, pad))
        tgt_flat = jnp.pad(tgt_flat, (0, pad))
    rows = (n + pad) // LANES

    # Row-tile sizing: big tiles for big inputs (amortize ~0.35us/step grid
    # overhead, hit the HBM-roofline plateau); full-array tile for tiny ones.
    if rows <= SUBLANES:
        row_tile = rows
        fold_rows = rows
    else:
        row_tile = min(MAX_ROW_TILE, (rows // SUBLANES) * SUBLANES)
        fold_rows = next(c for c in FOLD_CANDIDATES if row_tile % c == 0)

    t_blocks = pl.cdiv(rows, row_tile)
    splits = max(1, min(_num_core_splits(), t_blocks))
    blocks_per_core = pl.cdiv(t_blocks, splits)

    def in_index(c, i):
        # Clamp so the (splits * blocks_per_core) grid never indexes past the
        # last real block; any duplicated read is zeroed by the in-kernel mask.
        return (jnp.minimum(c * blocks_per_core + i, t_blocks - 1), 0)

    in_spec = pl.BlockSpec((row_tile, LANES), in_index)
    out_spec = pl.BlockSpec((fold_rows, LANES), lambda c, i: (c, 0))

    pred2d = pred_flat.reshape(rows, LANES)
    tgt2d = tgt_flat.reshape(rows, LANES)

    cost = pl.CostEstimate(
        flops=10 * n,
        transcendentals=2 * n,
        bytes_accessed=(n * pred.dtype.itemsize + n * target.dtype.itemsize
                        + splits * fold_rows * LANES * 4),
    )

    kernel = functools.partial(
        _bce_partial_kernel,
        n_valid=n, row_tile=row_tile, fold_rows=fold_rows,
        blocks_per_core=blocks_per_core)

    partials = pl.pallas_call(
        kernel,
        out_shape=jax.ShapeDtypeStruct((splits * fold_rows, LANES), jnp.float32),
        grid_spec=pltpu.PrefetchScalarGridSpec(
            num_scalar_prefetch=0,
            grid=(splits, blocks_per_core),
            in_specs=[in_spec, in_spec],
            out_specs=out_spec,
            scratch_shapes=[pltpu.VMEM((fold_rows, LANES), jnp.float32)],
        ),
        compiler_params=pltpu.CompilerParams(
            # TODO(synk): on v7x, confirm via xprof that both TCs are busy;
            # if not, switch the leading axis to pltpu.CORE_PARALLEL.
            dimension_semantics=("parallel", "arbitrary"),
            vmem_limit_bytes=VMEM_LIMIT_BYTES,
        ),
        cost_estimate=cost,
    )(pred2d, tgt2d)

    # Scalar epilogue, exactly matching the PyTorch module: focal scaling is
    # applied to the *mean* BCE (pt = exp(-mean_bce)).
    mean_bce = jnp.sum(partials) / jnp.float32(n)
    pt = jnp.exp(-mean_bce)
    return jnp.float32(alpha) * (1.0 - pt) ** jnp.float32(gamma) * mean_bce


def focal_loss_ref(pred, target, alpha=0.25, gamma=2.0):
    """Pure-JAX reference mirroring the PyTorch module."""
    x = pred.astype(jnp.float32)
    z = target.astype(jnp.float32)
    bce = jnp.mean(jnp.maximum(x, 0.0) - x * z + jnp.log1p(jnp.exp(-jnp.abs(x))))
    pt = jnp.exp(-bce)
    return alpha * (1.0 - pt) ** gamma * bce


if __name__ == "__main__":
    key = jax.random.PRNGKey(0)
    k1, k2 = jax.random.split(key)

    # NCHW-like logits and binary targets (batch=2, channels=4, spatial=16x16).
    pred = jax.random.normal(k1, (2, 4, 16, 16), dtype=jnp.float32)
    target = (jax.random.uniform(k2, (2, 4, 16, 16)) > 0.5).astype(jnp.float32)

    out = focal_loss(pred, target, alpha=0.25, gamma=2.0)
    out = jax.block_until_ready(out)

    ref = focal_loss_ref(pred, target, alpha=0.25, gamma=2.0)
    assert jnp.allclose(out, ref, rtol=1e-5, atol=1e-6), (out, ref)

    print("KERNEL_OK")
</pallas_src>

<mosaic_0001>
module attributes {stable_mosaic.version = 11 : i64} {
  func.func @_bce_partial_kernel(%arg0: i32, %arg1: i32, %arg2: memref<16x128xf32, #tpu.memory_space<vmem>>, %arg3: memref<16x128xf32, #tpu.memory_space<vmem>>, %arg4: memref<16x128xf32, #tpu.memory_space<vmem>>, %arg5: memref<16x128xf32, #tpu.memory_space<vmem>>) attributes {dimension_semantics = [#tpu.dimension_semantics<parallel>, #tpu.dimension_semantics<arbitrary>], iteration_bounds = array<i64: 1, 1>, scalar_prefetch = 0 : i64, scratch_operands = 1 : i64, tpu.core_type = #tpu.core_type<tc>, window_params = [{transform_indices = @transform_0, window_bounds = array<i64: 16, 128>}, {transform_indices = @transform_1, window_bounds = array<i64: 16, 128>}, {transform_indices = @transform_2, window_bounds = array<i64: 16, 128>}]} {
    %c0_i32 = arith.constant 0 : i32
    %0 = arith.cmpi eq, %arg1, %c0_i32 : i32
    %1 = arith.extui %0 : i1 to i32
    %c0_i32_0 = arith.constant 0 : i32
    %2 = arith.cmpi ne, %1, %c0_i32_0 : i32
    scf.if %2 {
      %cst_12 = arith.constant 0.000000e+00 : f32
      %35 = vector.broadcast %cst_12 : f32 to vector<16x128xf32>
      %c0_13 = arith.constant 0 : index
      %c0_14 = arith.constant 0 : index
      %36 = vector.load %arg5[%c0_13, %c0_14] : memref<16x128xf32, #tpu.memory_space<vmem>>, vector<16x128xf32>
      tpu.vector_store %arg5[%c0_13, %c0_14], %35 {strides = array<i32>} : memref<16x128xf32, #tpu.memory_space<vmem>>, vector<16x128xf32>,
    } else {
    }
    %c0 = arith.constant 0 : index
    %c0_1 = arith.constant 0 : index
    %3 = vector.load %arg2[%c0, %c0_1] : memref<16x128xf32, #tpu.memory_space<vmem>>, vector<16x128xf32>
    %c0_2 = arith.constant 0 : index
    %c0_3 = arith.constant 0 : index
    %4 = vector.load %arg3[%c0_2, %c0_3] : memref<16x128xf32, #tpu.memory_space<vmem>>, vector<16x128xf32>
    %cst = arith.constant 0.000000e+00 : f32
    %5 = vector.broadcast %cst : f32 to vector<16x128xf32>
    %6 = arith.maximumf %3, %5 : vector<16x128xf32>
    %7 = arith.mulf %3, %4 : vector<16x128xf32>
    %8 = arith.subf %6, %7 : vector<16x128xf32>
    %9 = math.absf %3 : vector<16x128xf32>
    %cst_4 = arith.constant 0.000000e+00 : f32
    %10 = vector.broadcast %cst_4 : f32 to vector<16x128xf32>
    %11 = arith.subf %10, %9 : vector<16x128xf32>
    %12 = math.exp %11 : vector<16x128xf32>
    %13 = math.log1p %12 : vector<16x128xf32>
    %14 = arith.addf %8, %13 : vector<16x128xf32>
    %c1_i32 = arith.constant 1 : i32
    %15 = arith.muli %arg0, %c1_i32 : i32
    %16 = arith.addi %15, %arg1 : i32
    %c16_i32 = arith.constant 16 : i32
    %17 = arith.muli %16, %c16_i32 : i32
    %18 = tpu.iota {dimensions = array<i32: 0>} : vector<16x128xi32>
    %19 = tpu.iota {dimensions = array<i32: 1>} : vector<16x128xi32>
    %20 = vector.broadcast %17 : i32 to vector<16x128xi32>
    %21 = arith.addi %20, %18 : vector<16x128xi32>
    %c128_i32 = arith.constant 128 : i32
    %22 = vector.broadcast %c128_i32 : i32 to vector<16x128xi32>
    %23 = arith.muli %21, %22 : vector<16x128xi32>
    %24 = arith.addi %23, %19 : vector<16x128xi32>
    %c2048_i32 = arith.constant 2048 : i32
    %25 = vector.broadcast %c2048_i32 : i32 to vector<16x128xi32>
    %26 = arith.cmpi slt, %24, %25 : vector<16x128xi32>
    %cst_5 = arith.constant 0.000000e+00 : f32
    %27 = vector.broadcast %cst_5 : f32 to vector<16x128xf32>
    %28 = arith.select %26, %14, %27 : vector<16x128xi1>, vector<16x128xf32>
    %c0_6 = arith.constant 0 : index
    %c0_7 = arith.constant 0 : index
    %29 = vector.load %arg5[%c0_6, %c0_7] : memref<16x128xf32, #tpu.memory_space<vmem>>, vector<16x128xf32>
    %30 = arith.addf %29, %28 : vector<16x128xf32>
    %c0_8 = arith.constant 0 : index
    %c0_9 = arith.constant 0 : index
    %31 = vector.load %arg5[%c0_8, %c0_9] : memref<16x128xf32, #tpu.memory_space<vmem>>, vector<16x128xf32>
    tpu.vector_store %arg5[%c0_8, %c0_9], %30 {strides = array<i32>} : memref<16x128xf32, #tpu.memory_space<vmem>>, vector<16x128xf32>,
    %c0_i32_10 = arith.constant 0 : i32
    %32 = arith.cmpi eq, %arg1, %c0_i32_10 : i32
    %33 = arith.extui %32 : i1 to i32
    %c0_i32_11 = arith.constant 0 : i32
    %34 = arith.cmpi ne, %33, %c0_i32_11 : i32
    scf.if %34 {
      %c0_12 = arith.constant 0 : index
      %c0_13 = arith.constant 0 : index
      %35 = vector.load %arg5[%c0_12, %c0_13] : memref<16x128xf32, #tpu.memory_space<vmem>>, vector<16x128xf32>
      %c0_14 = arith.constant 0 : index
      %c0_15 = arith.constant 0 : index
      %36 = vector.load %arg4[%c0_14, %c0_15] : memref<16x128xf32, #tpu.memory_space<vmem>>, vector<16x128xf32>
      tpu.vector_store %arg4[%c0_14, %c0_15], %35 {strides = array<i32>} : memref<16x128xf32, #tpu.memory_space<vmem>>, vector<16x128xf32>,
    } else {
    }
    return
  }
  func.func @transform_0(%arg0: i32, %arg1: i32) -> (i32, i32) {
    %c1_i32 = arith.constant 1 : i32
    %0 = arith.muli %arg0, %c1_i32 : i32
    %1 = arith.addi %0, %arg1 : i32
    %c0_i32 = arith.constant 0 : i32
    %2 = arith.minsi %1, %c0_i32 : i32
    %c0_i32_0 = arith.constant 0 : i32
    %c0_i32_1 = arith.constant 0 : i32
    return %2, %c0_i32_0 : i32, i32
  }
  func.func @transform_1(%arg0: i32, %arg1: i32) -> (i32, i32) {
    %c1_i32 = arith.constant 1 : i32
    %0 = arith.muli %arg0, %c1_i32 : i32
    %1 = arith.addi %0, %arg1 : i32
    %c0_i32 = arith.constant 0 : i32
    %2 = arith.minsi %1, %c0_i32 : i32
    %c0_i32_0 = arith.constant 0 : i32
    %c0_i32_1 = arith.constant 0 : i32
    return %2, %c0_i32_0 : i32, i32
  }
  func.func @transform_2(%arg0: i32, %arg1: i32) -> (i32, i32) {
    %c0_i32 = arith.constant 0 : i32
    %c0_i32_0 = arith.constant 0 : i32
    return %arg0, %c0_i32 : i32, i32
  }
}

</mosaic_0001>

<llo_original>
// kernel: tpu_custom_call.1
$region0: #{tpu_custom_call.1}
  #allocation0 [shape = 'u32[]', space=smem, size = 0x4, offset = 0x4, fixed_abs, tag = 'smem constant byte address 0x4 - core index']
  #allocation1 [shape = 'u32[144,128]{1,0:T(1,128)}', space=vmem, size = 0x12000, scoped, tag = 'internal scratch']
  #allocation2 [shape = 'f32[16,128]{1,0:T(8,128)}', space=vmem, size = 0x2000, scoped, tag = 'scratch operand']
  %s0 = inlined_call_operand.hbm [shape: f32[16,128], index: 0, kind: input, shape index: {}]
  %s1 = inlined_call_operand.hbm [shape: f32[16,128], index: 1, kind: input, shape index: {}]
  %s2 = inlined_call_operand.hbm [shape: f32[16,128], index: 2, kind: output, shape index: {}]
  %s3 = sld [smem:[#allocation0]]
  $region34: #{tpu_custom_call.1} parent=0
    _
  %s5 = ssub.s32 1, %s3
  %s6 = scalar_select 0, %s5, %s3
  $region1: #{tpu_custom_call.1} parent=0
    #allocation3 [shape = 'u8[8192]{0}', space=vmem, size = 0x2000, scoped, tag = 'input window, operand 0, single buffered']
    #allocation4 [shape = 's32[1]{0}', space=sflag, size = 0x4, scoped, tag = 'scoped memory for tpu_custom_call.1']
    #allocation5 [shape = 's32[1]{0}', space=sflag, size = 0x4, scoped, tag = 'scoped memory for tpu_custom_call.1']
    #allocation6 [shape = 'u8[8192]{0}', space=vmem, size = 0x2000, scoped, tag = 'input window, operand 1, single buffered']
    #allocation7 [shape = 's32[1]{0}', space=sflag, size = 0x4, scoped, tag = 'scoped memory for tpu_custom_call.1']
    #allocation8 [shape = 'u8[8192]{0}', space=vmem, size = 0x2000, scoped, tag = 'output window, operand 0, single buffered']
    %7 = vsyncpa [#allocation4], 0
    %8 = vsyncpa [#allocation7], 0
    %9 = vsyncpa [#allocation5], 0
    // Predicated region
    $region2: #{tpu_custom_call.1} parent=1 // pred_check
      _
    $region3: #{tpu_custom_call.1} parent=1 // pred_check_branch
      %11 = sbr.rel (0) target = $region5
    $region4: #{tpu_custom_call.1} parent=1 // pred_region
      %s12 = sadd.s32 0, 0
      %p13 = scmp.lt.s32.totalorder %s12, 0
      %s14 = scalar_select %p13, %s12, 0
      %s15 = smul.u32 2, %s14
      %s17 = ssub.s32 256, 256
      %18 = vsyncadd [#allocation4], %s17
      %s19 = smul.addr %s15, 128
      %s20 = scalar_lea.hbm %s0, %s19
      %s21 = sshll.u32 [#allocation3], 4
      %s22 = int_to_ptr.vmem [resolvable:$true] %s21
      %27 = dma.hbm_to_vmem [thread:$0]  %s20, 256, %s22, [#allocation4], 128, 128, 8
    $region5: #{tpu_custom_call.1} parent=1 // pred_fallthru
      _
    // Predicated region
    $region6: #{tpu_custom_call.1} parent=1 // pred_check
      _
    $region7: #{tpu_custom_call.1} parent=1 // pred_check_branch
      %29 = sbr.rel (0) target = $region9
    $region8: #{tpu_custom_call.1} parent=1 // pred_region
      %s30 = sadd.s32 0, 0
      %p31 = scmp.lt.s32.totalorder %s30, 0
      %s32 = scalar_select %p31, %s30, 0
      %s33 = smul.u32 2, %s32
      %s35 = ssub.s32 256, 256
      %36 = vsyncadd [#allocation7], %s35
      %s37 = smul.addr %s33, 128
      %s38 = scalar_lea.hbm %s1, %s37
      %s39 = sshll.u32 [#allocation6], 4
      %s40 = int_to_ptr.vmem [resolvable:$true] %s39
      %45 = dma.hbm_to_vmem [thread:$0]  %s38, 256, %s40, [#allocation7], 128, 128, 8
    $region9: #{tpu_custom_call.1} parent=1 // pred_fallthru
      _
    // Predicated region
    $region10: #{tpu_custom_call.1} parent=1 // pred_check
      _
    $region11: #{tpu_custom_call.1} parent=1 // pred_check_branch
      %47 = sbr.rel (0) target = $region13
    $region12: #{tpu_custom_call.1} parent=1 // pred_region
      %48 = dma.done [#allocation4], 256
    $region13: #{tpu_custom_call.1} parent=1 // pred_fallthru
      _
    // Predicated region
    $region14: #{tpu_custom_call.1} parent=1 // pred_check
      _
    $region15: #{tpu_custom_call.1} parent=1 // pred_check_branch
      %50 = sbr.rel (0) target = $region17
    $region16: #{tpu_custom_call.1} parent=1 // pred_region
      %51 = dma.done [#allocation7], 256
    $region17: #{tpu_custom_call.1} parent=1 // pred_fallthru
      _
    %s52 = sadd.s32 0, 0
    %p53 = scmp.lt.s32.totalorder %s52, 0
    %s54 = scalar_select %p53, %s52, 0
    %s55 = smul.u32 2, %s54
    %s56 = sadd.s32 0, 0
    %p57 = scmp.lt.s32.totalorder %s56, 0
    %s58 = scalar_select %p57, %s56, 0
    %s59 = smul.u32 2, %s58
    %p60 = scmp.eq.s32.totalorder 0, 0
    // Predicated region
    $region18: #{tpu_custom_call.1} parent=1 // pred_check
      %p61 = pneg %p60
    $region19: #{tpu_custom_call.1} parent=1 // pred_check_branch
      %63 = sbr.rel (%p61) target = $region21
    $region20: #{tpu_custom_call.1} parent=1 // pred_region
      %64 = vst [vmem:[#allocation2] sm:$0xff] 0.0
      %65 = vst [vmem:[#allocation2 + $0x8] sm:$0xff] 0.0
    $region21: #{tpu_custom_call.1} parent=1 // pred_fallthru
      _
    %v66 = vld [vmem:[#allocation3] sm:$0xff]
    %v67 = vld [vmem:[#allocation3 + $0x8] sm:$0xff]
    %v68 = vld [vmem:[#allocation6] sm:$0xff]
    %v69 = vld [vmem:[#allocation6 + $0x8] sm:$0xff]
    %v70 = vmax.f32 %v66, 0.0
    %v71 = vmax.f32 %v67, 0.0
    %v72 = vmul.f32 %v66, %v68
    %v73 = vmul.f32 %v67, %v69
    %v74 = vsub.f32 %v70, %v72
    %v75 = vsub.f32 %v71, %v73
    %v76 = vand.u32 2147483647, %v66
    %v77 = vand.u32 2147483647, %v67
    %v78 = vsub.f32 0.0, %v76
    %v79 = vsub.f32 0.0, %v77
    %v80 = vmul.f32 %v78, 1.442695
    %v81 = vpow.pop %v80
    %v82 = vmul.f32 %v79, 1.442695
    %v83 = vpow.pop %v82
    %v84 = vadd.f32 %v81, 1.0
    %v85 = vlog2.pop %v84
    %v86 = vmul.f32 %v85, 0.6931472
    %v87 = vmul.f32 -0.5, %v81
    %v88 = vadd.f32 %v87, 1.0
    %v89 = vmul.f32 %v88, %v81
    %v90 = vand.u32 2147483647, %v81
    %vm91 = vcmp.lt.f32.partialorder %v90, 0.0004427343
    %v92 = vsel %vm91, %v89, %v86
    %v93 = vadd.f32 %v83, 1.0
    %v94 = vlog2.pop %v93
    %v95 = vmul.f32 %v94, 0.6931472
    %v96 = vmul.f32 -0.5, %v83
    %v97 = vadd.f32 %v96, 1.0
    %v98 = vmul.f32 %v97, %v83
    %v99 = vand.u32 2147483647, %v83
    %vm100 = vcmp.lt.f32.partialorder %v99, 0.0004427343
    %v101 = vsel %vm100, %v98, %v95
    %v102 = vadd.f32 %v74, %v92
    %v103 = vadd.f32 %v75, %v101
    %s104 = sadd.s32 0, 0
    %s105 = smul.u32 %s104, 16
    %v106 = vlaneseq
    %v107 = vshrl.u32 %v106, 7
    %v108 = vadd.s32 %v107, 8
    %v109 = vlaneseq
    %v110 = vand.u32 %v109, 127
    %v111 = vstv %s105
    %v112 = vadd.s32 %v111, %v107
    %v113 = vadd.s32 %v111, %v108
    %v114 = vmul.u32 %v112, 128
    %v115 = vmul.u32 %v113, 128
    %v116 = vadd.s32 %v114, %v110
    %v117 = vadd.s32 %v115, %v110
    %vm118 = vcmp.lt.s32.totalorder %v116, 2048
    %vm119 = vcmp.lt.s32.totalorder %v117, 2048
    %v120 = vsel %vm118, %v102, 0.0
    %v121 = vsel %vm119, %v103, 0.0
    %v122 = vld [vmem:[#allocation2] sm:$0xff]
    %v123 = vld [vmem:[#allocation2 + $0x8] sm:$0xff]
    %v124 = vadd.f32 %v122, %v120
    %v125 = vadd.f32 %v123, %v121
    %126 = vst [vmem:[#allocation2] sm:$0xff] %v124
    %127 = vst [vmem:[#allocation2 + $0x8] sm:$0xff] %v125
    // Predicated region
    $region22: #{tpu_custom_call.1} parent=1 // pred_check
      %p128 = pneg %p60
    $region23: #{tpu_custom_call.1} parent=1 // pred_check_branch
      %130 = sbr.rel (%p128) target = $region25
    $region24: #{tpu_custom_call.1} parent=1 // pred_region
      %v131 = vld [vmem:[#allocation2] sm:$0xff]
      %v132 = vld [vmem:[#allocation2 + $0x8] sm:$0xff]
      %133 = vst [vmem:[#allocation8] sm:$0xff] %v131
      %134 = vst [vmem:[#allocation8 + $0x8] sm:$0xff] %v132
    $region25: #{tpu_custom_call.1} parent=1 // pred_fallthru
      _
    // Predicated region
    $region26: #{tpu_custom_call.1} parent=1 // pred_check
      _
    $region27: #{tpu_custom_call.1} parent=1 // pred_check_branch
      %136 = sbr.rel (0) target = $region29
    $region28: #{tpu_custom_call.1} parent=1 // pred_region
      %s138 = ssub.s32 256, 256
      %139 = vsyncadd [#allocation5], %s138
      %s140 = sshll.u32 [#allocation8], 4
      %s141 = int_to_ptr.vmem [resolvable:$true] %s140
      %146 = dma.vmem_to_hbm [thread:$0]  %s141, 256, %s2, [#allocation5], 128, 128, 8
    $region29: #{tpu_custom_call.1} parent=1 // pred_fallthru
      _
    // Predicated region
    $region30: #{tpu_custom_call.1} parent=1 // pred_check
      _
    $region31: #{tpu_custom_call.1} parent=1 // pred_check_branch
      %148 = sbr.rel (0) target = $region33
    $region32: #{tpu_custom_call.1} parent=1 // pred_region
      %149 = dma.done [#allocation5], 256
    $region33: #{tpu_custom_call.1} parent=1 // pred_fallthru
      _
    %150 = vsyncpa [#allocation4], 1
    %151 = vsyncpa [#allocation7], 1
    %152 = vsyncpa [#allocation5], 1

</llo_original>
